<compile_context>
chip_gen: v6e
topology: v6e:2x2x1
jax: 0.10.0
libtpu: 0.0.40
codegen_flags: <defaults>
</compile_context>

<pallas_src>
import functools

import jax
import jax.numpy as jnp
from jax.experimental import pallas as pl
from jax.experimental.pallas import tpu as pltpu


def _round_up(n, m):
    return ((n + m - 1) // m) * m


def _classifier_kernel(n_out, x_ref, w1_ref, b1_ref, w2_ref, b2_ref,
                       sig_ref, probs_ref, fc2_ref):
    # x_ref:  (TB, D_pad)   bf16     w1_ref: (D_pad, H_pad) bf16
    # b1_ref: (1, H_pad)    f32      w2_ref: (H_pad, O_pad) bf16
    # b2_ref: (1, O_pad)    f32      outputs: (TB, O_pad)   f32
    x = x_ref[...]

    # fc1: bf16 MXU inputs, f32 accumulation; ReLU epilogue in f32.
    h = jnp.dot(x, w1_ref[...], preferred_element_type=jnp.float32) + b1_ref[...]
    h = jnp.maximum(h, 0.0)

    # fc2 (pre-activation logits).
    fc2 = jnp.dot(h.astype(jnp.bfloat16), w2_ref[...],
                  preferred_element_type=jnp.float32) + b2_ref[...]

    # sigmoid(fc2): exp + approx reciprocal run on the EUP slot.
    sig = pl.reciprocal(1.0 + jnp.exp(-fc2), approx=True)

    # softmax over dim=1 of sigmoid(fc2), restricted to the valid (unpadded)
    # output columns.  sig in [0, 1] so no max-subtraction is needed.
    col = jax.lax.broadcasted_iota(jnp.int32, sig.shape, dimension=1)
    e = jnp.where(col < n_out, jnp.exp(sig), 0.0)
    probs = e * pl.reciprocal(jnp.sum(e, axis=1, keepdims=True), approx=True)

    sig_ref[...] = sig
    probs_ref[...] = probs
    fc2_ref[...] = fc2


@jax.jit
def classifier_forward(x, w1, b1, w2, b2):
    """x: (B, C, H, W) NCHW.  Returns (sigmoid(fc2), softmax(sigmoid(fc2), 1), fc2)."""
    B = x.shape[0]
    x_flat = x.reshape(B, -1)              # torch.flatten(x, 1)
    D = x_flat.shape[1]
    H = w1.shape[1]
    O = w2.shape[1]

    # Lane / sublane friendly padded sizes.
    D_pad = _round_up(D, 128)
    H_pad = _round_up(H, 128)
    O_pad = _round_up(O, 128)

    # Batch tile: multiple of 8 sublanes, capped so double-buffered x/output
    # tiles + resident weights sit far below v7x's 64 MiB VMEM.
    TB = min(256, _round_up(B, 8))
    B_pad = _round_up(B, TB)

    # Zero-pad (does not change valid outputs) and cast MXU operands to bf16.
    xp = jnp.zeros((B_pad, D_pad), jnp.bfloat16).at[:B, :D].set(
        x_flat.astype(jnp.bfloat16))
    w1p = jnp.zeros((D_pad, H_pad), jnp.bfloat16).at[:D, :H].set(
        w1.astype(jnp.bfloat16))
    b1p = jnp.zeros((1, H_pad), jnp.float32).at[0, :H].set(b1.astype(jnp.float32))
    w2p = jnp.zeros((H_pad, O_pad), jnp.bfloat16).at[:H, :O].set(
        w2.astype(jnp.bfloat16))
    b2p = jnp.zeros((1, O_pad), jnp.float32).at[0, :O].set(b2.astype(jnp.float32))

    grid = (B_pad // TB,)
    out_spec = pl.BlockSpec((TB, O_pad), lambda i: (i, 0))
    out_shape = jax.ShapeDtypeStruct((B_pad, O_pad), jnp.float32)

    sig, probs, fc2 = pl.pallas_call(
        functools.partial(_classifier_kernel, O),
        out_shape=(out_shape, out_shape, out_shape),
        grid=grid,
        in_specs=[
            pl.BlockSpec((TB, D_pad), lambda i: (i, 0)),     # x: tiled over batch
            pl.BlockSpec((D_pad, H_pad), lambda i: (0, 0)),  # w1: resident
            pl.BlockSpec((1, H_pad), lambda i: (0, 0)),      # b1: resident
            pl.BlockSpec((H_pad, O_pad), lambda i: (0, 0)),  # w2: resident
            pl.BlockSpec((1, O_pad), lambda i: (0, 0)),      # b2: resident
        ],
        out_specs=(out_spec, out_spec, out_spec),
        compiler_params=pltpu.CompilerParams(
            dimension_semantics=("parallel",),   # shard batch tiles over v7x's 2 TCs
            vmem_limit_bytes=32 * 1024 * 1024,
        ),
    )(xp, w1p, b1p, w2p, b2p)

    return sig[:B, :O], probs[:B, :O], fc2[:B, :O]


def init_params(key, n_inputs, num_neurons, n_outputs):
    """Deterministic init mimicking nn.Linear's uniform(-1/sqrt(fan_in), 1/sqrt(fan_in))."""
    k1, k2, k3, k4 = jax.random.split(key, 4)
    bound1 = 1.0 / jnp.sqrt(n_inputs)
    bound2 = 1.0 / jnp.sqrt(num_neurons)
    # Stored pre-transposed: (in_features, out_features).
    w1 = jax.random.uniform(k1, (n_inputs, num_neurons), jnp.float32, -bound1, bound1)
    b1 = jax.random.uniform(k2, (num_neurons,), jnp.float32, -bound1, bound1)
    w2 = jax.random.uniform(k3, (num_neurons, n_outputs), jnp.float32, -bound2, bound2)
    b2 = jax.random.uniform(k4, (n_outputs,), jnp.float32, -bound2, bound2)
    return w1, b1, w2, b2


if __name__ == "__main__":
    # Small shapes consistent with the module: flattened image -> hidden -> classes.
    B, C, Himg, Wimg = 2, 4, 16, 16        # n_inputs = 4*16*16 = 1024
    NUM_NEURONS = 32                        # args.numneurons
    N_OUTPUTS = 8

    key = jax.random.PRNGKey(0)
    kx, kp = jax.random.split(key)
    x = jax.random.normal(kx, (B, C, Himg, Wimg), dtype=jnp.float32)
    w1, b1, w2, b2 = init_params(kp, C * Himg * Wimg, NUM_NEURONS, N_OUTPUTS)

    sig, probs, fc2 = classifier_forward(x, w1, b1, w2, b2)
    jax.block_until_ready((sig, probs, fc2))

    # Pure-JAX f32 reference (same semantics as the PyTorch forward).
    # Tolerances are relaxed because the kernel uses bf16 MXU inputs and
    # approx reciprocals.
    xf = x.reshape(B, -1)
    h_ref = jnp.maximum(xf @ w1 + b1, 0.0)
    fc2_ref = h_ref @ w2 + b2
    sig_ref = jax.nn.sigmoid(fc2_ref)
    probs_ref = jax.nn.softmax(sig_ref, axis=1)
    assert jnp.allclose(fc2, fc2_ref, atol=3e-2, rtol=3e-2), "fc2 mismatch"
    assert jnp.allclose(sig, sig_ref, atol=3e-2, rtol=3e-2), "sigmoid mismatch"
    assert jnp.allclose(probs, probs_ref, atol=3e-2, rtol=3e-2), "softmax mismatch"

    print("KERNEL_OK")
</pallas_src>

<mosaic_0001>
module attributes {stable_mosaic.version = 11 : i64} {
  func.func @_classifier_kernel(%arg0: i32, %arg1: memref<8x1024xbf16, #tpu.memory_space<vmem>>, %arg2: memref<1024x128xbf16, #tpu.memory_space<vmem>>, %arg3: memref<1x128xf32, #tpu.memory_space<vmem>>, %arg4: memref<128x128xbf16, #tpu.memory_space<vmem>>, %arg5: memref<1x128xf32, #tpu.memory_space<vmem>>, %arg6: memref<8x128xf32, #tpu.memory_space<vmem>>, %arg7: memref<8x128xf32, #tpu.memory_space<vmem>>, %arg8: memref<8x128xf32, #tpu.memory_space<vmem>>) attributes {dimension_semantics = [#tpu.dimension_semantics<parallel>], iteration_bounds = array<i64: 1>, scalar_prefetch = 0 : i64, scratch_operands = 0 : i64, tpu.core_type = #tpu.core_type<tc>, window_params = [{transform_indices = @transform_0, window_bounds = array<i64: 8, 1024>}, {pipeline_mode = #tpu.pipeline_mode<synchronous>, transform_indices = @transform_1, window_bounds = array<i64: 1024, 128>}, {pipeline_mode = #tpu.pipeline_mode<synchronous>, transform_indices = @transform_2, window_bounds = array<i64: 1, 128>}, {pipeline_mode = #tpu.pipeline_mode<synchronous>, transform_indices = @transform_3, window_bounds = array<i64: 128, 128>}, {pipeline_mode = #tpu.pipeline_mode<synchronous>, transform_indices = @transform_4, window_bounds = array<i64: 1, 128>}, {transform_indices = @transform_5, window_bounds = array<i64: 8, 128>}, {transform_indices = @transform_6, window_bounds = array<i64: 8, 128>}, {transform_indices = @transform_7, window_bounds = array<i64: 8, 128>}]} {
    %c0 = arith.constant 0 : index
    %c0_0 = arith.constant 0 : index
    %0 = vector.load %arg1[%c0, %c0_0] : memref<8x1024xbf16, #tpu.memory_space<vmem>>, vector<8x1024xbf16>
    %c0_1 = arith.constant 0 : index
    %c0_2 = arith.constant 0 : index
    %1 = vector.load %arg2[%c0_1, %c0_2] : memref<1024x128xbf16, #tpu.memory_space<vmem>>, vector<1024x128xbf16>
    %cst = arith.constant dense<0.000000e+00> : vector<8x128xf32>
    %2 = tpu.matmul %0, %1, %cst {dimension_numbers = #tpu.dot_dimension_numbers<[1], [0], [0], [1], [0, 0, 1, 1], [], []>} : vector<8x1024xbf16>, vector<1024x128xbf16>, vector<8x128xf32> -> vector<8x128xf32>
    %c0_3 = arith.constant 0 : index
    %c0_4 = arith.constant 0 : index
    %3 = vector.load %arg3[%c0_3, %c0_4] : memref<1x128xf32, #tpu.memory_space<vmem>>, vector<1x128xf32>
    %4 = vector.broadcast %3 : vector<1x128xf32> to vector<8x128xf32>
    %5 = arith.addf %2, %4 : vector<8x128xf32>
    %cst_5 = arith.constant 0.000000e+00 : f32
    %6 = vector.broadcast %cst_5 : f32 to vector<8x128xf32>
    %7 = arith.maximumf %5, %6 : vector<8x128xf32>
    %8 = arith.truncf %7 : vector<8x128xf32> to vector<8x128xbf16>
    %c0_6 = arith.constant 0 : index
    %c0_7 = arith.constant 0 : index
    %9 = vector.load %arg4[%c0_6, %c0_7] : memref<128x128xbf16, #tpu.memory_space<vmem>>, vector<128x128xbf16>
    %cst_8 = arith.constant dense<0.000000e+00> : vector<8x128xf32>
    %10 = tpu.matmul %8, %9, %cst_8 {dimension_numbers = #tpu.dot_dimension_numbers<[1], [0], [0], [1], [0, 0, 1, 1], [], []>} : vector<8x128xbf16>, vector<128x128xbf16>, vector<8x128xf32> -> vector<8x128xf32>
    %c0_9 = arith.constant 0 : index
    %c0_10 = arith.constant 0 : index
    %11 = vector.load %arg5[%c0_9, %c0_10] : memref<1x128xf32, #tpu.memory_space<vmem>>, vector<1x128xf32>
    %12 = vector.broadcast %11 : vector<1x128xf32> to vector<8x128xf32>
    %13 = arith.addf %10, %12 : vector<8x128xf32>
    %cst_11 = arith.constant 0.000000e+00 : f32
    %14 = vector.broadcast %cst_11 : f32 to vector<8x128xf32>
    %15 = arith.subf %14, %13 : vector<8x128xf32>
    %16 = math.exp %15 : vector<8x128xf32>
    %cst_12 = arith.constant 1.000000e+00 : f32
    %17 = vector.broadcast %cst_12 : f32 to vector<8x128xf32>
    %18 = arith.addf %17, %16 : vector<8x128xf32>
    %19 = tpu.reciprocal %18 {approx = true} : vector<8x128xf32> -> vector<8x128xf32>
    %20 = tpu.iota {dimensions = array<i32: 1>} : vector<8x128xi32>
    %c8_i32 = arith.constant 8 : i32
    %21 = vector.broadcast %c8_i32 : i32 to vector<8x128xi32>
    %22 = arith.cmpi slt, %20, %21 : vector<8x128xi32>
    %23 = math.exp %19 : vector<8x128xf32>
    %cst_13 = arith.constant 0.000000e+00 : f32
    %24 = vector.broadcast %cst_13 : f32 to vector<8x128xf32>
    %25 = arith.select %22, %23, %24 : vector<8x128xi1>, vector<8x128xf32>
    %cst_14 = arith.constant dense<0.000000e+00> : vector<8xf32>
    %26 = vector.multi_reduction <add>, %25, %cst_14 [1] : vector<8x128xf32> to vector<8xf32>
    %27 = vector.shape_cast %26 : vector<8xf32> to vector<8x1xf32>
    %28 = tpu.reciprocal %27 {approx = true} : vector<8x1xf32> -> vector<8x1xf32>
    %29 = vector.broadcast %28 : vector<8x1xf32> to vector<8x128xf32>
    %30 = arith.mulf %25, %29 : vector<8x128xf32>
    %c0_15 = arith.constant 0 : index
    %c0_16 = arith.constant 0 : index
    %31 = vector.load %arg6[%c0_15, %c0_16] : memref<8x128xf32, #tpu.memory_space<vmem>>, vector<8x128xf32>
    tpu.vector_store %arg6[%c0_15, %c0_16], %19 {strides = array<i32>} : memref<8x128xf32, #tpu.memory_space<vmem>>, vector<8x128xf32>,
    %c0_17 = arith.constant 0 : index
    %c0_18 = arith.constant 0 : index
    %32 = vector.load %arg7[%c0_17, %c0_18] : memref<8x128xf32, #tpu.memory_space<vmem>>, vector<8x128xf32>
    tpu.vector_store %arg7[%c0_17, %c0_18], %30 {strides = array<i32>} : memref<8x128xf32, #tpu.memory_space<vmem>>, vector<8x128xf32>,
    %c0_19 = arith.constant 0 : index
    %c0_20 = arith.constant 0 : index
    %33 = vector.load %arg8[%c0_19, %c0_20] : memref<8x128xf32, #tpu.memory_space<vmem>>, vector<8x128xf32>
    tpu.vector_store %arg8[%c0_19, %c0_20], %13 {strides = array<i32>} : memref<8x128xf32, #tpu.memory_space<vmem>>, vector<8x128xf32>,
    return
  }
  func.func @transform_0(%arg0: i32) -> (i32, i32) {
    %c0_i32 = arith.constant 0 : i32
    %c0_i32_0 = arith.constant 0 : i32
    return %arg0, %c0_i32 : i32, i32
  }
  func.func @transform_1(%arg0: i32) -> (i32, i32) {
    %c0_i32 = arith.constant 0 : i32
    %c0_i32_0 = arith.constant 0 : i32
    %c0_i32_1 = arith.constant 0 : i32
    return %c0_i32, %c0_i32_0 : i32, i32
  }
  func.func @transform_2(%arg0: i32) -> (i32, i32) {
    %c0_i32 = arith.constant 0 : i32
    %c0_i32_0 = arith.constant 0 : i32
    %c0_i32_1 = arith.constant 0 : i32
    return %c0_i32, %c0_i32_0 : i32, i32
  }
  func.func @transform_3(%arg0: i32) -> (i32, i32) {
    %c0_i32 = arith.constant 0 : i32
    %c0_i32_0 = arith.constant 0 : i32
    %c0_i32_1 = arith.constant 0 : i32
    return %c0_i32, %c0_i32_0 : i32, i32
  }
  func.func @transform_4(%arg0: i32) -> (i32, i32) {
    %c0_i32 = arith.constant 0 : i32
    %c0_i32_0 = arith.constant 0 : i32
    %c0_i32_1 = arith.constant 0 : i32
    return %c0_i32, %c0_i32_0 : i32, i32
  }
  func.func @transform_5(%arg0: i32) -> (i32, i32) {
    %c0_i32 = arith.constant 0 : i32
    %c0_i32_0 = arith.constant 0 : i32
    return %arg0, %c0_i32 : i32, i32
  }
  func.func @transform_6(%arg0: i32) -> (i32, i32) {
    %c0_i32 = arith.constant 0 : i32
    %c0_i32_0 = arith.constant 0 : i32
    return %arg0, %c0_i32 : i32, i32
  }
  func.func @transform_7(%arg0: i32) -> (i32, i32) {
    %c0_i32 = arith.constant 0 : i32
    %c0_i32_0 = arith.constant 0 : i32
    return %arg0, %c0_i32 : i32, i32
  }
}

</mosaic_0001>

<llo_original>
// kernel: classifier_forward.1
$region0: #{classifier_forward.1}
  #allocation0 [shape = 'u32[]', space=smem, size = 0x4, offset = 0x4, fixed_abs, tag = 'smem constant byte address 0x4 - core index']
  #allocation1 [shape = 'u32[144,128]{1,0:T(1,128)}', space=vmem, size = 0x12000, scoped, tag = 'internal scratch']
  %s0 = inlined_call_operand.vmem [shape: bf16[8,1024], index: 0, kind: input, shape index: {}]
  %s1 = inlined_call_operand.vmem [shape: bf16[1024,128], index: 1, kind: input, shape index: {}]
  %s2 = inlined_call_operand.vmem [shape: f32[1,128], index: 2, kind: input, shape index: {}]
  %s3 = inlined_call_operand.vmem [shape: bf16[128,128], index: 3, kind: input, shape index: {}]
  %s4 = inlined_call_operand.vmem [shape: f32[1,128], index: 4, kind: input, shape index: {}]
  %s5 = inlined_call_operand.vmem [shape: f32[8,128], index: 5, kind: output, shape index: {0}]
  %s6 = inlined_call_operand.vmem [shape: f32[8,128], index: 6, kind: output, shape index: {1}]
  %s7 = inlined_call_operand.vmem [shape: f32[8,128], index: 7, kind: output, shape index: {2}]
  %8 = xla_tuple %s5, %s6, %s7
  %s9 = sld [smem:[#allocation0]]
  $region46: #{classifier_forward.1} parent=0
    _
  %s11 = ssub.s32 1, %s9
  %s12 = scalar_select 0, %s11, %s9
  // Predicated region
  $region2: #{classifier_forward.1} parent=0 // pred_check
    _
  $region3: #{classifier_forward.1} parent=0 // pred_check_branch
    %14 = sbr.rel (0) target = $region5
  $region4: #{classifier_forward.1} parent=0 // pred_region
    _
  $region5: #{classifier_forward.1} parent=0 // pred_fallthru
    _
  // Predicated region
  $region6: #{classifier_forward.1} parent=0 // pred_check
    _
  $region7: #{classifier_forward.1} parent=0 // pred_check_branch
    %16 = sbr.rel (0) target = $region9
  $region8: #{classifier_forward.1} parent=0 // pred_region
    _
  $region9: #{classifier_forward.1} parent=0 // pred_fallthru
    _
  // Predicated region
  $region10: #{classifier_forward.1} parent=0 // pred_check
    _
  $region11: #{classifier_forward.1} parent=0 // pred_check_branch
    %18 = sbr.rel (0) target = $region13
  $region12: #{classifier_forward.1} parent=0 // pred_region
    _
  $region13: #{classifier_forward.1} parent=0 // pred_fallthru
    _
  // Predicated region
  $region14: #{classifier_forward.1} parent=0 // pred_check
    _
  $region15: #{classifier_forward.1} parent=0 // pred_check_branch
    %20 = sbr.rel (0) target = $region17
  $region16: #{classifier_forward.1} parent=0 // pred_region
    _
  $region17: #{classifier_forward.1} parent=0 // pred_fallthru
    _
  // Predicated region
  $region18: #{classifier_forward.1} parent=0 // pred_check
    _
  $region19: #{classifier_forward.1} parent=0 // pred_check_branch
    %22 = sbr.rel (0) target = $region21
  $region20: #{classifier_forward.1} parent=0 // pred_region
    _
  $region21: #{classifier_forward.1} parent=0 // pred_fallthru
    _
  %v24 = vld [vmem:[%s0] sm:$0xff]
  %v25 = vld [vmem:[%s0 + $0x8] sm:$0xff]
  %v26 = vld [vmem:[%s0 + $0x10] sm:$0xff]
  %v27 = vld [vmem:[%s0 + $0x18] sm:$0xff]
  %v28 = vld [vmem:[%s1] sm:$0xf]
  %v29 = vld [vmem:[%s1 + $0x4] sm:$0xf]
  %v30 = vld [vmem:[%s1 + $0x8] sm:$0xf]
  %v31 = vld [vmem:[%s1 + $0xc] sm:$0xf]
  %v32 = vld [vmem:[%s1 + $0x10] sm:$0xf]
  %v33 = vld [vmem:[%s1 + $0x14] sm:$0xf]
  %v34 = vld [vmem:[%s1 + $0x18] sm:$0xf]
  %v35 = vld [vmem:[%s1 + $0x1c] sm:$0xf]
  %v36 = vld [vmem:[%s1 + $0x20] sm:$0xf]
  %v37 = vld [vmem:[%s1 + $0x24] sm:$0xf]
  %v38 = vld [vmem:[%s1 + $0x28] sm:$0xf]
  %v39 = vld [vmem:[%s1 + $0x2c] sm:$0xf]
  %v40 = vld [vmem:[%s1 + $0x30] sm:$0xf]
  %v41 = vld [vmem:[%s1 + $0x34] sm:$0xf]
  %v42 = vld [vmem:[%s1 + $0x38] sm:$0xf]
  %v43 = vld [vmem:[%s1 + $0x3c] sm:$0xf]
  %v44 = vld [vmem:[%s1 + $0x40] sm:$0xf]
  %v45 = vld [vmem:[%s1 + $0x44] sm:$0xf]
  %v46 = vld [vmem:[%s1 + $0x48] sm:$0xf]
  %v47 = vld [vmem:[%s1 + $0x4c] sm:$0xf]
  %v48 = vld [vmem:[%s1 + $0x50] sm:$0xf]
  %v49 = vld [vmem:[%s1 + $0x54] sm:$0xf]
  %v50 = vld [vmem:[%s1 + $0x58] sm:$0xf]
  %v51 = vld [vmem:[%s1 + $0x5c] sm:$0xf]
  %v52 = vld [vmem:[%s1 + $0x60] sm:$0xf]
  %v53 = vld [vmem:[%s1 + $0x64] sm:$0xf]
  %v54 = vld [vmem:[%s1 + $0x68] sm:$0xf]
  %v55 = vld [vmem:[%s1 + $0x6c] sm:$0xf]
  %v56 = vld [vmem:[%s1 + $0x70] sm:$0xf]
  %v57 = vld [vmem:[%s1 + $0x74] sm:$0xf]
  %v58 = vld [vmem:[%s1 + $0x78] sm:$0xf]
  %v59 = vld [vmem:[%s1 + $0x7c] sm:$0xf]
  %v60 = vld [vmem:[%s1 + $0x80] sm:$0xf]
  %v61 = vld [vmem:[%s1 + $0x84] sm:$0xf]
  %v62 = vld [vmem:[%s1 + $0x88] sm:$0xf]
  %v63 = vld [vmem:[%s1 + $0x8c] sm:$0xf]
  %v64 = vld [vmem:[%s1 + $0x90] sm:$0xf]
  %v65 = vld [vmem:[%s1 + $0x94] sm:$0xf]
  %v66 = vld [vmem:[%s1 + $0x98] sm:$0xf]
  %v67 = vld [vmem:[%s1 + $0x9c] sm:$0xf]
  %v68 = vld [vmem:[%s1 + $0xa0] sm:$0xf]
  %v69 = vld [vmem:[%s1 + $0xa4] sm:$0xf]
  %v70 = vld [vmem:[%s1 + $0xa8] sm:$0xf]
  %v71 = vld [vmem:[%s1 + $0xac] sm:$0xf]
  %v72 = vld [vmem:[%s1 + $0xb0] sm:$0xf]
  %v73 = vld [vmem:[%s1 + $0xb4] sm:$0xf]
  %v74 = vld [vmem:[%s1 + $0xb8] sm:$0xf]
  %v75 = vld [vmem:[%s1 + $0xbc] sm:$0xf]
  %v76 = vld [vmem:[%s1 + $0xc0] sm:$0xf]
  %v77 = vld [vmem:[%s1 + $0xc4] sm:$0xf]
  %v78 = vld [vmem:[%s1 + $0xc8] sm:$0xf]
  %v79 = vld [vmem:[%s1 + $0xcc] sm:$0xf]
  %v80 = vld [vmem:[%s1 + $0xd0] sm:$0xf]
  %v81 = vld [vmem:[%s1 + $0xd4] sm:$0xf]
  %v82 = vld [vmem:[%s1 + $0xd8] sm:$0xf]
  %v83 = vld [vmem:[%s1 + $0xdc] sm:$0xf]
  %v84 = vld [vmem:[%s1 + $0xe0] sm:$0xf]
  %v85 = vld [vmem:[%s1 + $0xe4] sm:$0xf]
  %v86 = vld [vmem:[%s1 + $0xe8] sm:$0xf]
  %v87 = vld [vmem:[%s1 + $0xec] sm:$0xf]
  %v88 = vld [vmem:[%s1 + $0xf0] sm:$0xf]
  %v89 = vld [vmem:[%s1 + $0xf4] sm:$0xf]
  %v90 = vld [vmem:[%s1 + $0xf8] sm:$0xf]
  %v91 = vld [vmem:[%s1 + $0xfc] sm:$0xf]
  %v92 = vld [vmem:[%s1 + $0x100] sm:$0xf]
  %v93 = vld [vmem:[%s1 + $0x104] sm:$0xf]
  %v94 = vld [vmem:[%s1 + $0x108] sm:$0xf]
  %v95 = vld [vmem:[%s1 + $0x10c] sm:$0xf]
  %v96 = vld [vmem:[%s1 + $0x110] sm:$0xf]
  %v97 = vld [vmem:[%s1 + $0x114] sm:$0xf]
  %v98 = vld [vmem:[%s1 + $0x118] sm:$0xf]
  %v99 = vld [vmem:[%s1 + $0x11c] sm:$0xf]
  %v100 = vld [vmem:[%s1 + $0x120] sm:$0xf]
  %v101 = vld [vmem:[%s1 + $0x124] sm:$0xf]
  %v102 = vld [vmem:[%s1 + $0x128] sm:$0xf]
  %v103 = vld [vmem:[%s1 + $0x12c] sm:$0xf]
  %v104 = vld [vmem:[%s1 + $0x130] sm:$0xf]
  %v105 = vld [vmem:[%s1 + $0x134] sm:$0xf]
  %v106 = vld [vmem:[%s1 + $0x138] sm:$0xf]
  %v107 = vld [vmem:[%s1 + $0x13c] sm:$0xf]
  %v108 = vld [vmem:[%s1 + $0x140] sm:$0xf]
  %v109 = vld [vmem:[%s1 + $0x144] sm:$0xf]
  %v110 = vld [vmem:[%s1 + $0x148] sm:$0xf]
  %v111 = vld [vmem:[%s1 + $0x14c] sm:$0xf]
  %v112 = vld [vmem:[%s1 + $0x150] sm:$0xf]
  %v113 = vld [vmem:[%s1 + $0x154] sm:$0xf]
  %v114 = vld [vmem:[%s1 + $0x158] sm:$0xf]
  %v115 = vld [vmem:[%s1 + $0x15c] sm:$0xf]
  %v116 = vld [vmem:[%s1 + $0x160] sm:$0xf]
  %v117 = vld [vmem:[%s1 + $0x164] sm:$0xf]
  %v118 = vld [vmem:[%s1 + $0x168] sm:$0xf]
  %v119 = vld [vmem:[%s1 + $0x16c] sm:$0xf]
  %v120 = vld [vmem:[%s1 + $0x170] sm:$0xf]
  %v121 = vld [vmem:[%s1 + $0x174] sm:$0xf]
  %v122 = vld [vmem:[%s1 + $0x178] sm:$0xf]
  %v123 = vld [vmem:[%s1 + $0x17c] sm:$0xf]
  %v124 = vld [vmem:[%s1 + $0x180] sm:$0xf]
  %v125 = vld [vmem:[%s1 + $0x184] sm:$0xf]
  %v126 = vld [vmem:[%s1 + $0x188] sm:$0xf]
  %v127 = vld [vmem:[%s1 + $0x18c] sm:$0xf]
  %v128 = vld [vmem:[%s1 + $0x190] sm:$0xf]
  %v129 = vld [vmem:[%s1 + $0x194] sm:$0xf]
  %v130 = vld [vmem:[%s1 + $0x198] sm:$0xf]
  %v131 = vld [vmem:[%s1 + $0x19c] sm:$0xf]
  %v132 = vld [vmem:[%s1 + $0x1a0] sm:$0xf]
  %v133 = vld [vmem:[%s1 + $0x1a4] sm:$0xf]
  %v134 = vld [vmem:[%s1 + $0x1a8] sm:$0xf]
  %v135 = vld [vmem:[%s1 + $0x1ac] sm:$0xf]
  %v136 = vld [vmem:[%s1 + $0x1b0] sm:$0xf]
  %v137 = vld [vmem:[%s1 + $0x1b4] sm:$0xf]
  %v138 = vld [vmem:[%s1 + $0x1b8] sm:$0xf]
  %v139 = vld [vmem:[%s1 + $0x1bc] sm:$0xf]
  %v140 = vld [vmem:[%s1 + $0x1c0] sm:$0xf]
  %v141 = vld [vmem:[%s1 + $0x1c4] sm:$0xf]
  %v142 = vld [vmem:[%s1 + $0x1c8] sm:$0xf]
  %v143 = vld [vmem:[%s1 + $0x1cc] sm:$0xf]
  %v144 = vld [vmem:[%s1 + $0x1d0] sm:$0xf]
  %v145 = vld [vmem:[%s1 + $0x1d4] sm:$0xf]
  %v146 = vld [vmem:[%s1 + $0x1d8] sm:$0xf]
  %v147 = vld [vmem:[%s1 + $0x1dc] sm:$0xf]
  %v148 = vld [vmem:[%s1 + $0x1e0] sm:$0xf]
  %v149 = vld [vmem:[%s1 + $0x1e4] sm:$0xf]
  %v150 = vld [vmem:[%s1 + $0x1e8] sm:$0xf]
  %v151 = vld [vmem:[%s1 + $0x1ec] sm:$0xf]
  %v152 = vld [vmem:[%s1 + $0x1f0] sm:$0xf]
  %v153 = vld [vmem:[%s1 + $0x1f4] sm:$0xf]
  %v154 = vld [vmem:[%s1 + $0x1f8] sm:$0xf]
  %v155 = vld [vmem:[%s1 + $0x1fc] sm:$0xf]
  %v156 = vld [vmem:[%s2] sm:$0x1]
  %v158 = vlaneseq
  %v159 = vshrl.u32 %v158, 7
  %v160 = vsub.s32 0, %v159
  %v161 = vrot.slane %v156, %v160
  %v167 = vunpack.c.l.b16 %v24
  %v168 = vunpack.c.h.b16 %v24
  %v169 = vunpack.c.l.b16 %v25
  %v170 = vunpack.c.h.b16 %v25
  %v171 = vunpack.c.l.b16 %v26
  %v172 = vunpack.c.h.b16 %v26
  %v173 = vunpack.c.l.b16 %v27
  %v174 = vunpack.c.h.b16 %v27
  %v175 = vpack.c.b16 %v167, %v167
  %v176 = vpack.c.b16 %v168, %v168
  %v177 = vpack.c.b16 %v169, %v169
  %v178 = vpack.c.b16 %v170, %v170
  %v179 = vpack.c.b16 %v171, %v171
  %v180 = vpack.c.b16 %v172, %v172
  %v181 = vpack.c.b16 %v173, %v173
  %v182 = vpack.c.b16 %v174, %v174
  %v319 = vunpack.c.l.b16 %v28
  %v320 = vunpack.c.l.b16 %v29
  %v321 = vunpack.c.l.b16 %v30
  %v322 = vunpack.c.l.b16 %v31
  %v323 = vunpack.c.l.b16 %v32
  %v324 = vunpack.c.l.b16 %v33
  %v325 = vunpack.c.l.b16 %v34
  %v326 = vunpack.c.l.b16 %v35
  %v327 = vunpack.c.l.b16 %v36
  %v328 = vunpack.c.l.b16 %v37
  %v329 = vunpack.c.l.b16 %v38
  %v330 = vunpack.c.l.b16 %v39
  %v331 = vunpack.c.l.b16 %v40
  %v332 = vunpack.c.l.b16 %v41
  %v333 = vunpack.c.l.b16 %v42
  %v334 = vunpack.c.l.b16 %v43
  %v335 = vunpack.c.l.b16 %v44
  %v336 = vunpack.c.l.b16 %v45
  %v337 = vunpack.c.l.b16 %v46
  %v338 = vunpack.c.l.b16 %v47
  %v339 = vunpack.c.l.b16 %v48
  %v340 = vunpack.c.l.b16 %v49
  %v341 = vunpack.c.l.b16 %v50
  %v342 = vunpack.c.l.b16 %v51
  %v343 = vunpack.c.l.b16 %v52
  %v344 = vunpack.c.l.b16 %v53
  %v345 = vunpack.c.l.b16 %v54
  %v346 = vunpack.c.l.b16 %v55
  %v347 = vunpack.c.l.b16 %v56
  %v348 = vunpack.c.l.b16 %v57
  %v349 = vunpack.c.l.b16 %v58
  %v350 = vunpack.c.l.b16 %v59
  %v351 = vunpack.c.l.b16 %v60
  %v352 = vunpack.c.l.b16 %v61
  %v353 = vunpack.c.l.b16 %v62
  %v354 = vunpack.c.l.b16 %v63
  %v355 = vunpack.c.l.b16 %v64
  %v356 = vunpack.c.l.b16 %v65
  %v357 = vunpack.c.l.b16 %v66
  %v358 = vunpack.c.l.b16 %v67
  %v359 = vunpack.c.l.b16 %v68
  %v360 = vunpack.c.l.b16 %v69
  %v361 = vunpack.c.l.b16 %v70
  %v362 = vunpack.c.l.b16 %v71
  %v363 = vunpack.c.l.b16 %v72
  %v364 = vunpack.c.l.b16 %v73
  %v365 = vunpack.c.l.b16 %v74
  %v366 = vunpack.c.l.b16 %v75
  %v367 = vunpack.c.l.b16 %v76
  %v368 = vunpack.c.l.b16 %v77
  %v369 = vunpack.c.l.b16 %v78
  %v370 = vunpack.c.l.b16 %v79
  %v371 = vunpack.c.l.b16 %v80
  %v372 = vunpack.c.l.b16 %v81
  %v373 = vunpack.c.l.b16 %v82
  %v374 = vunpack.c.l.b16 %v83
  %v375 = vunpack.c.l.b16 %v84
  %v376 = vunpack.c.l.b16 %v85
  %v377 = vunpack.c.l.b16 %v86
  %v378 = vunpack.c.l.b16 %v87
  %v379 = vunpack.c.l.b16 %v88
  %v380 = vunpack.c.l.b16 %v89
  %v381 = vunpack.c.l.b16 %v90
  %v382 = vunpack.c.l.b16 %v91
  %v383 = vunpack.c.l.b16 %v92
  %v384 = vunpack.c.l.b16 %v93
  %v385 = vunpack.c.l.b16 %v94
  %v386 = vunpack.c.l.b16 %v95
  %v387 = vunpack.c.l.b16 %v96
  %v388 = vunpack.c.l.b16 %v97
  %v389 = vunpack.c.l.b16 %v98
  %v390 = vunpack.c.l.b16 %v99
  %v391 = vunpack.c.l.b16 %v100
  %v392 = vunpack.c.l.b16 %v101
  %v393 = vunpack.c.l.b16 %v102
  %v394 = vunpack.c.l.b16 %v103
  %v395 = vunpack.c.l.b16 %v104
  %v396 = vunpack.c.l.b16 %v105
  %v397 = vunpack.c.l.b16 %v106
  %v398 = vunpack.c.l.b16 %v107
  %v399 = vunpack.c.l.b16 %v108
  %v400 = vunpack.c.l.b16 %v109
  %v401 = vunpack.c.l.b16 %v110
  %v402 = vunpack.c.l.b16 %v111
  %v403 = vunpack.c.l.b16 %v112
  %v404 = vunpack.c.l.b16 %v113
  %v405 = vunpack.c.l.b16 %v114
  %v406 = vunpack.c.l.b16 %v115
  %v407 = vunpack.c.l.b16 %v116
  %v408 = vunpack.c.l.b16 %v117
  %v409 = vunpack.c.l.b16 %v118
  %v410 = vunpack.c.l.b16 %v119
  %v411 = vunpack.c.l.b16 %v120
  %v412 = vunpack.c.l.b16 %v121
  %v413 = vunpack.c.l.b16 %v122
  %v414 = vunpack.c.l.b16 %v123
  %v415 = vunpack.c.l.b16 %v124
  %v416 = vunpack.c.l.b16 %v125
  %v417 = vunpack.c.l.b16 %v126
  %v418 = vunpack.c.l.b16 %v127
  %v419 = vunpack.c.l.b16 %v128
  %v420 = vunpack.c.l.b16 %v129
  %v421 = vunpack.c.l.b16 %v130
  %v422 = vunpack.c.l.b16 %v131
  %v423 = vunpack.c.l.b16 %v132
  %v424 = vunpack.c.l.b16 %v133
  %v425 = vunpack.c.l.b16 %v134
  %v426 = vunpack.c.l.b16 %v135
  %v427 = vunpack.c.l.b16 %v136
  %v428 = vunpack.c.l.b16 %v137
  %v429 = vunpack.c.l.b16 %v138
  %v430 = vunpack.c.l.b16 %v139
  %v431 = vunpack.c.l.b16 %v140
  %v432 = vunpack.c.l.b16 %v141
  %v433 = vunpack.c.l.b16 %v142
  %v434 = vunpack.c.l.b16 %v143
  %v435 = vunpack.c.l.b16 %v144
  %v436 = vunpack.c.l.b16 %v145
  %v437 = vunpack.c.l.b16 %v146
  %v438 = vunpack.c.l.b16 %v147
  %v439 = vunpack.c.l.b16 %v148
  %v440 = vunpack.c.l.b16 %v149
  %v441 = vunpack.c.l.b16 %v150
  %v442 = vunpack.c.l.b16 %v151
  %v443 = vunpack.c.l.b16 %v152
  %v444 = vunpack.c.l.b16 %v153
  %v445 = vunpack.c.l.b16 %v154
  %v446 = vunpack.c.l.b16 %v155
  %v447 = vpack.c.b16 %v320, %v319
  %v448 = vpack.c.b16 %v322, %v321
  %v449 = vpack.c.b16 %v324, %v323
  %v450 = vpack.c.b16 %v326, %v325
  %v451 = vpack.c.b16 %v328, %v327
  %v452 = vpack.c.b16 %v330, %v329
  %v453 = vpack.c.b16 %v332, %v331
  %v454 = vpack.c.b16 %v334, %v333
  %v455 = vpack.c.b16 %v336, %v335
  %v456 = vpack.c.b16 %v338, %v337
  %v457 = vpack.c.b16 %v340, %v339
  %v458 = vpack.c.b16 %v342, %v341
  %v459 = vpack.c.b16 %v344, %v343
  %v460 = vpack.c.b16 %v346, %v345
  %v461 = vpack.c.b16 %v348, %v347
  %v462 = vpack.c.b16 %v350, %v349
  %v463 = vpack.c.b16 %v352, %v351
  %v464 = vpack.c.b16 %v354, %v353
  %v465 = vpack.c.b16 %v356, %v355
  %v466 = vpack.c.b16 %v358, %v357
  %v467 = vpack.c.b16 %v360, %v359
  %v468 = vpack.c.b16 %v362, %v361
  %v469 = vpack.c.b16 %v364, %v363
  %v470 = vpack.c.b16 %v366, %v365
  %v471 = vpack.c.b16 %v368, %v367
  %v472 = vpack.c.b16 %v370, %v369
  %v473 = vpack.c.b16 %v372, %v371
  %v474 = vpack.c.b16 %v374, %v373
  %v475 = vpack.c.b16 %v376, %v375
  %v476 = vpack.c.b16 %v378, %v377
  %v477 = vpack.c.b16 %v380, %v379
  %v478 = vpack.c.b16 %v382, %v381
  %v479 = vpack.c.b16 %v384, %v383
  %v480 = vpack.c.b16 %v386, %v385
  %v481 = vpack.c.b16 %v388, %v387
  %v482 = vpack.c.b16 %v390, %v389
  %v483 = vpack.c.b16 %v392, %v391
  %v484 = vpack.c.b16 %v394, %v393
  %v485 = vpack.c.b16 %v396, %v395
  %v486 = vpack.c.b16 %v398, %v397
  %v487 = vpack.c.b16 %v400, %v399
  %v488 = vpack.c.b16 %v402, %v401
  %v489 = vpack.c.b16 %v404, %v403
  %v490 = vpack.c.b16 %v406, %v405
  %v491 = vpack.c.b16 %v408, %v407
  %v492 = vpack.c.b16 %v410, %v409
  %v493 = vpack.c.b16 %v412, %v411
  %v494 = vpack.c.b16 %v414, %v413
  %v495 = vpack.c.b16 %v416, %v415
  %v496 = vpack.c.b16 %v418, %v417
  %v497 = vpack.c.b16 %v420, %v419
  %v498 = vpack.c.b16 %v422, %v421
  %v499 = vpack.c.b16 %v424, %v423
  %v500 = vpack.c.b16 %v426, %v425
  %v501 = vpack.c.b16 %v428, %v427
  %v502 = vpack.c.b16 %v430, %v429
  %v503 = vpack.c.b16 %v432, %v431
  %v504 = vpack.c.b16 %v434, %v433
  %v505 = vpack.c.b16 %v436, %v435
  %v506 = vpack.c.b16 %v438, %v437
  %v507 = vpack.c.b16 %v440, %v439
  %v508 = vpack.c.b16 %v442, %v441
  %v509 = vpack.c.b16 %v444, %v443
  %v510 = vpack.c.b16 %v446, %v445
  %575 = vmatprep.subr.bf16.mxu0 0
  %576 = vmatpush1.bf16.msra.mxu0 %v454
  %577 = vmatprep.subr.bf16.mxu0 0
  %578 = vmatpush1.bf16.msra.mxu0 %v453
  %579 = vmatprep.subr.bf16.mxu0 0
  %580 = vmatpush1.bf16.msra.mxu0 %v452
  %581 = vmatprep.subr.bf16.mxu0 0
  %582 = vmatpush1.bf16.msra.mxu0 %v451
  %583 = vmatprep.subr.bf16.mxu0 0
  %584 = vmatpush1.bf16.msra.mxu0 %v450
  %585 = vmatprep.subr.bf16.mxu0 0
  %586 = vmatpush1.bf16.msra.mxu0 %v449
  %587 = vmatprep.subr.bf16.mxu0 0
  %588 = vmatpush1.bf16.msra.mxu0 %v448
  %589 = vmatprep.subr.bf16.mxu0 0
  %590 = vmatpush1.bf16.msra.mxu0 %v447
  %591 = vmatprep.subr.bf16.mxu0 0
  %592 = vmatpush2.bf16.msra.mxu0 %v462
  %593 = vmatprep.subr.bf16.mxu0 0
  %594 = vmatpush2.bf16.msra.mxu0 %v461
  %595 = vmatprep.subr.bf16.mxu0 0
  %596 = vmatpush2.bf16.msra.mxu0 %v460
  %597 = vmatprep.subr.bf16.mxu0 0
  %598 = vmatpush2.bf16.msra.mxu0 %v459
  %599 = vmatprep.subr.bf16.mxu0 0
  %600 = vmatpush2.bf16.msra.mxu0 %v458
  %601 = vmatprep.subr.bf16.mxu0 0
  %602 = vmatpush2.bf16.msra.mxu0 %v457
  %603 = vmatprep.subr.bf16.mxu0 0
  %604 = vmatpush2.bf16.msra.mxu0 %v456
  %605 = vmatprep.subr.bf16.mxu0 0
  %606 = vmatpush2.bf16.msra.mxu0 %v455
  %607 = vmatprep.mubr.bf16.mxu0 %v176
  %608 = vmatmul.mubr.bf16.gmra.mxu0 %v175
  %v609 = vpop.f32.mrf.mxu0
  %v610 = vadd.f32 %v161, %v609
  %v611 = vpop.f32.mrf.mxu0
  %v612 = vpop.f32.mrf.mxu0
  %v613 = vpop.f32.mrf.mxu0
  %614 = vdwg.mxu0
  %615 = vmatprep.subr.bf16.mxu0 0
  %616 = vmatpush1.bf16.msra.mxu0 %v470
  %617 = vmatprep.subr.bf16.mxu0 0
  %618 = vmatpush1.bf16.msra.mxu0 %v469
  %619 = vmatprep.subr.bf16.mxu0 0
  %620 = vmatpush1.bf16.msra.mxu0 %v468
  %621 = vmatprep.subr.bf16.mxu0 0
  %622 = vmatpush1.bf16.msra.mxu0 %v467
  %623 = vmatprep.subr.bf16.mxu0 0
  %624 = vmatpush1.bf16.msra.mxu0 %v466
  %625 = vmatprep.subr.bf16.mxu0 0
  %626 = vmatpush1.bf16.msra.mxu0 %v465
  %627 = vmatprep.subr.bf16.mxu0 0
  %628 = vmatpush1.bf16.msra.mxu0 %v464
  %629 = vmatprep.subr.bf16.mxu0 0
  %630 = vmatpush1.bf16.msra.mxu0 %v463
  %631 = vmatprep.subr.bf16.mxu0 0
  %632 = vmatpush2.bf16.msra.mxu0 %v478
  %633 = vmatprep.subr.bf16.mxu0 0
  %634 = vmatpush2.bf16.msra.mxu0 %v477
  %635 = vmatprep.subr.bf16.mxu0 0
  %636 = vmatpush2.bf16.msra.mxu0 %v476
  %637 = vmatprep.subr.bf16.mxu0 0
  %638 = vmatpush2.bf16.msra.mxu0 %v475
  %639 = vmatprep.subr.bf16.mxu0 0
  %640 = vmatpush2.bf16.msra.mxu0 %v474
  %641 = vmatprep.subr.bf16.mxu0 0
  %642 = vmatpush2.bf16.msra.mxu0 %v473
  %643 = vmatprep.subr.bf16.mxu0 0
  %644 = vmatpush2.bf16.msra.mxu0 %v472
  %645 = vmatprep.subr.bf16.mxu0 0
  %646 = vmatpush2.bf16.msra.mxu0 %v471
  %647 = vmatprep.mubr.bf16.mxu0 %v178
  %648 = vmatmul.mubr.bf16.gmra.mxu0 %v177
  %v649 = vpop.f32.mrf.mxu0
  %v650 = vadd.f32 %v610, %v649
  %v651 = vpop.f32.mrf.mxu0
  %v652 = vpop.f32.mrf.mxu0
  %v653 = vpop.f32.mrf.mxu0
  %654 = vdwg.mxu0
  %655 = vmatprep.subr.bf16.mxu0 0
  %656 = vmatpush1.bf16.msra.mxu0 %v486
  %657 = vmatprep.subr.bf16.mxu0 0
  %658 = vmatpush1.bf16.msra.mxu0 %v485
  %659 = vmatprep.subr.bf16.mxu0 0
  %660 = vmatpush1.bf16.msra.mxu0 %v484
  %661 = vmatprep.subr.bf16.mxu0 0
  %662 = vmatpush1.bf16.msra.mxu0 %v483
  %663 = vmatprep.subr.bf16.mxu0 0
  %664 = vmatpush1.bf16.msra.mxu0 %v482
  %665 = vmatprep.subr.bf16.mxu0 0
  %666 = vmatpush1.bf16.msra.mxu0 %v481
  %667 = vmatprep.subr.bf16.mxu0 0
  %668 = vmatpush1.bf16.msra.mxu0 %v480
  %669 = vmatprep.subr.bf16.mxu0 0
  %670 = vmatpush1.bf16.msra.mxu0 %v479
  %671 = vmatprep.subr.bf16.mxu0 0
  %672 = vmatpush2.bf16.msra.mxu0 %v494
  %673 = vmatprep.subr.bf16.mxu0 0
  %674 = vmatpush2.bf16.msra.mxu0 %v493
  %675 = vmatprep.subr.bf16.mxu0 0
  %676 = vmatpush2.bf16.msra.mxu0 %v492
  %677 = vmatprep.subr.bf16.mxu0 0
  %678 = vmatpush2.bf16.msra.mxu0 %v491
  %679 = vmatprep.subr.bf16.mxu0 0
  %680 = vmatpush2.bf16.msra.mxu0 %v490
  %681 = vmatprep.subr.bf16.mxu0 0
  %682 = vmatpush2.bf16.msra.mxu0 %v489
  %683 = vmatprep.subr.bf16.mxu0 0
  %684 = vmatpush2.bf16.msra.mxu0 %v488
  %685 = vmatprep.subr.bf16.mxu0 0
  %686 = vmatpush2.bf16.msra.mxu0 %v487
  %687 = vmatprep.mubr.bf16.mxu0 %v180
  %688 = vmatmul.mubr.bf16.gmra.mxu0 %v179
  %v689 = vpop.f32.mrf.mxu0
  %v690 = vadd.f32 %v650, %v689
  %v691 = vpop.f32.mrf.mxu0
  %v692 = vpop.f32.mrf.mxu0
  %v693 = vpop.f32.mrf.mxu0
  %694 = vdwg.mxu0
  %695 = vmatprep.subr.bf16.mxu0 0
  %696 = vmatpush1.bf16.msra.mxu0 %v502
  %697 = vmatprep.subr.bf16.mxu0 0
  %698 = vmatpush1.bf16.msra.mxu0 %v501
  %699 = vmatprep.subr.bf16.mxu0 0
  %700 = vmatpush1.bf16.msra.mxu0 %v500
  %701 = vmatprep.subr.bf16.mxu0 0
  %702 = vmatpush1.bf16.msra.mxu0 %v499
  %703 = vmatprep.subr.bf16.mxu0 0
  %704 = vmatpush1.bf16.msra.mxu0 %v498
  %705 = vmatprep.subr.bf16.mxu0 0
  %706 = vmatpush1.bf16.msra.mxu0 %v497
  %707 = vmatprep.subr.bf16.mxu0 0
  %708 = vmatpush1.bf16.msra.mxu0 %v496
  %709 = vmatprep.subr.bf16.mxu0 0
  %710 = vmatpush1.bf16.msra.mxu0 %v495
  %711 = vmatprep.subr.bf16.mxu0 0
  %712 = vmatpush2.bf16.msra.mxu0 %v510
  %713 = vmatprep.subr.bf16.mxu0 0
  %714 = vmatpush2.bf16.msra.mxu0 %v509
  %715 = vmatprep.subr.bf16.mxu0 0
  %716 = vmatpush2.bf16.msra.mxu0 %v508
  %717 = vmatprep.subr.bf16.mxu0 0
  %718 = vmatpush2.bf16.msra.mxu0 %v507
  %719 = vmatprep.subr.bf16.mxu0 0
  %720 = vmatpush2.bf16.msra.mxu0 %v506
  %721 = vmatprep.subr.bf16.mxu0 0
  %722 = vmatpush2.bf16.msra.mxu0 %v505
  %723 = vmatprep.subr.bf16.mxu0 0
  %724 = vmatpush2.bf16.msra.mxu0 %v504
  %725 = vmatprep.subr.bf16.mxu0 0
  %726 = vmatpush2.bf16.msra.mxu0 %v503
  %727 = vmatprep.mubr.bf16.mxu0 %v182
  %728 = vmatmul.mubr.bf16.gmra.mxu0 %v181
  %v729 = vpop.f32.mrf.mxu0
  %v730 = vadd.f32 %v690, %v729
  %v731 = vpop.f32.mrf.mxu0
  %v732 = vpop.f32.mrf.mxu0
  %v733 = vpop.f32.mrf.mxu0
  %734 = vdwg.mxu0
  %v735 = vmax.f32 %v730, 0.0
  %v736 = vpack.c.bf16 %v735, %v735
  %v737 = vld [vmem:[%s3] sm:$0xf]
  %v738 = vld [vmem:[%s3 + $0x4] sm:$0xf]
  %v739 = vld [vmem:[%s3 + $0x8] sm:$0xf]
  %v740 = vld [vmem:[%s3 + $0xc] sm:$0xf]
  %v741 = vld [vmem:[%s3 + $0x10] sm:$0xf]
  %v742 = vld [vmem:[%s3 + $0x14] sm:$0xf]
  %v743 = vld [vmem:[%s3 + $0x18] sm:$0xf]
  %v744 = vld [vmem:[%s3 + $0x1c] sm:$0xf]
  %v745 = vld [vmem:[%s3 + $0x20] sm:$0xf]
  %v746 = vld [vmem:[%s3 + $0x24] sm:$0xf]
  %v747 = vld [vmem:[%s3 + $0x28] sm:$0xf]
  %v748 = vld [vmem:[%s3 + $0x2c] sm:$0xf]
  %v749 = vld [vmem:[%s3 + $0x30] sm:$0xf]
  %v750 = vld [vmem:[%s3 + $0x34] sm:$0xf]
  %v751 = vld [vmem:[%s3 + $0x38] sm:$0xf]
  %v752 = vld [vmem:[%s3 + $0x3c] sm:$0xf]
  %v753 = vld [vmem:[%s4] sm:$0x1]
  %v755 = vlaneseq
  %v756 = vshrl.u32 %v755, 7
  %v757 = vsub.s32 0, %v756
  %v758 = vrot.slane %v753, %v757
  %v776 = vunpack.c.l.b16 %v737
  %v777 = vunpack.c.l.b16 %v738
  %v778 = vunpack.c.l.b16 %v739
  %v779 = vunpack.c.l.b16 %v740
  %v780 = vunpack.c.l.b16 %v741
  %v781 = vunpack.c.l.b16 %v742
  %v782 = vunpack.c.l.b16 %v743
  %v783 = vunpack.c.l.b16 %v744
  %v784 = vunpack.c.l.b16 %v745
  %v785 = vunpack.c.l.b16 %v746
  %v786 = vunpack.c.l.b16 %v747
  %v787 = vunpack.c.l.b16 %v748
  %v788 = vunpack.c.l.b16 %v749
  %v789 = vunpack.c.l.b16 %v750
  %v790 = vunpack.c.l.b16 %v751
  %v791 = vunpack.c.l.b16 %v752
  %v792 = vpack.c.b16 %v777, %v776
  %v793 = vpack.c.b16 %v779, %v778
  %v794 = vpack.c.b16 %v781, %v780
  %v795 = vpack.c.b16 %v783, %v782
  %v796 = vpack.c.b16 %v785, %v784
  %v797 = vpack.c.b16 %v787, %v786
  %v798 = vpack.c.b16 %v789, %v788
  %v799 = vpack.c.b16 %v791, %v790
  %808 = vmatprep.subr.bf16.mxu0 0
  %809 = vmatpush1.bf16.msra.mxu0 %v799
  %810 = vmatprep.subr.bf16.mxu0 0
  %811 = vmatpush1.bf16.msra.mxu0 %v798
  %812 = vmatprep.subr.bf16.mxu0 0
  %813 = vmatpush1.bf16.msra.mxu0 %v797
  %814 = vmatprep.subr.bf16.mxu0 0
  %815 = vmatpush1.bf16.msra.mxu0 %v796
  %816 = vmatprep.subr.bf16.mxu0 0
  %817 = vmatpush1.bf16.msra.mxu0 %v795
  %818 = vmatprep.subr.bf16.mxu0 0
  %819 = vmatpush1.bf16.msra.mxu0 %v794
  %820 = vmatprep.subr.bf16.mxu0 0
  %821 = vmatpush1.bf16.msra.mxu0 %v793
  %822 = vmatprep.subr.bf16.mxu0 0
  %823 = vmatpush1.bf16.msra.mxu0 %v792
  %824 = vmatprep.subr.bf16.mxu0 0
  %825 = vmatpush2.bf16.msra.mxu0 0
  %826 = vmatprep.subr.bf16.mxu0 0
  %827 = vmatpush2.bf16.msra.mxu0 0
  %828 = vmatprep.subr.bf16.mxu0 0
  %829 = vmatpush2.bf16.msra.mxu0 0
  %830 = vmatprep.subr.bf16.mxu0 0
  %831 = vmatpush2.bf16.msra.mxu0 0
  %832 = vmatprep.subr.bf16.mxu0 0
  %833 = vmatpush2.bf16.msra.mxu0 0
  %834 = vmatprep.subr.bf16.mxu0 0
  %835 = vmatpush2.bf16.msra.mxu0 0
  %836 = vmatprep.subr.bf16.mxu0 0
  %837 = vmatpush2.bf16.msra.mxu0 0
  %838 = vmatprep.subr.bf16.mxu0 0
  %839 = vmatpush2.bf16.msra.mxu0 0
  %840 = vmatprep.mubr.bf16.mxu0 0
  %841 = vmatmul.mubr.bf16.gmra.mxu0 %v736
  %v842 = vpop.f32.mrf.mxu0
  %v843 = vadd.f32 %v758, %v842
  %v844 = vpop.f32.mrf.mxu0
  %v845 = vpop.f32.mrf.mxu0
  %v846 = vpop.f32.mrf.mxu0
  %847 = vdwg.mxu0
  %v848 = vsub.f32 0.0, %v843
  %v849 = vmul.f32 %v848, 1.442695
  %v850 = vpow.pop %v849
  %v851 = vadd.f32 %v850, 1.0
  %v852 = vrcp.pop %v851
  %v853 = vlaneseq
  %v854 = vand.u32 %v853, 127
  %vm855 = vcmp.lt.s32.totalorder %v854, 8
  %v856 = vmul.f32 %v852, 1.442695
  %v857 = vpow.pop %v856
  %v858 = vsel %vm855, %v857, 0.0
  %859 = vadd.xlane.f32.xlu0 %v858
  %v860 = vpop.xlane.xlu0 %859
  %v861 = vrcp.pop %v860
  %v862 = vmul.f32 %v858, %v861
  %863 = vst [vmem:[%s5] sm:$0xff] %v852
  %864 = vst [vmem:[%s6] sm:$0xff] %v862
  %865 = vst [vmem:[%s7] sm:$0xff] %v843
  // Predicated region
  $region22: #{classifier_forward.1} parent=0 // pred_check
    _
  $region23: #{classifier_forward.1} parent=0 // pred_check_branch
    %867 = sbr.rel (0) target = $region25
  $region24: #{classifier_forward.1} parent=0 // pred_region
    _
  $region25: #{classifier_forward.1} parent=0 // pred_fallthru
    _
  // Predicated region
  $region26: #{classifier_forward.1} parent=0 // pred_check
    _
  $region27: #{classifier_forward.1} parent=0 // pred_check_branch
    %869 = sbr.rel (0) target = $region29
  $region28: #{classifier_forward.1} parent=0 // pred_region
    _
  $region29: #{classifier_forward.1} parent=0 // pred_fallthru
    _
  // Predicated region
  $region30: #{classifier_forward.1} parent=0 // pred_check
    _
  $region31: #{classifier_forward.1} parent=0 // pred_check_branch
    %871 = sbr.rel (0) target = $region33
  $region32: #{classifier_forward.1} parent=0 // pred_region
    _
  $region33: #{classifier_forward.1} parent=0 // pred_fallthru
    _
  // Predicated region
  $region34: #{classifier_forward.1} parent=0 // pred_check
    _
  $region35: #{classifier_forward.1} parent=0 // pred_check_branch
    %873 = sbr.rel (0) target = $region37
  $region36: #{classifier_forward.1} parent=0 // pred_region
    _
  $region37: #{classifier_forward.1} parent=0 // pred_fallthru
    _
  // Predicated region
  $region38: #{classifier_forward.1} parent=0 // pred_check
    _
  $region39: #{classifier_forward.1} parent=0 // pred_check_branch
    %875 = sbr.rel (0) target = $region41
  $region40: #{classifier_forward.1} parent=0 // pred_region
    _
  $region41: #{classifier_forward.1} parent=0 // pred_fallthru
    _
  // Predicated region
  $region42: #{classifier_forward.1} parent=0 // pred_check
    _
  $region43: #{classifier_forward.1} parent=0 // pred_check_branch
    %877 = sbr.rel (0) target = $region45
  $region44: #{classifier_forward.1} parent=0 // pred_region
    _
  $region45: #{classifier_forward.1} parent=0 // pred_fallthru
    _

</llo_original>
